<compile_context>
chip_gen: v6e
topology: v6e:2x2x1
jax: 0.10.0
libtpu: 0.0.40
codegen_flags: <defaults>
</compile_context>

<pallas_src>
import jax
import jax.numpy as jnp
from jax.experimental import pallas as pl
from jax.experimental.pallas import tpu as pltpu


def _mlp_kernel(x_ref, w1_ref, b1_ref, w2_ref, b2_ref, w3_ref, b3_ref, o_ref):
    # layer 1 (fused block-diagonal of l11/l12) + ReLU
    h1 = jnp.dot(x_ref[...], w1_ref[...],
                 preferred_element_type=jnp.float32) + b1_ref[...]
    h1 = jnp.maximum(h1, 0.0)
    # layer 2 + ReLU
    h2 = jnp.dot(h1, w2_ref[...],
                 preferred_element_type=jnp.float32) + b2_ref[...]
    h2 = jnp.maximum(h2, 0.0)
    # layer 3 (no activation)
    o_ref[...] = (jnp.dot(h2, w3_ref[...],
                          preferred_element_type=jnp.float32)
                  + b3_ref[...]).astype(o_ref.dtype)


def init_params(key):
    """Deterministic PyTorch-style init: U(-1/sqrt(fan_in), 1/sqrt(fan_in)).

    Weights are stored transposed as (in_features, out_features) so the kernel
    computes x @ W, matching PyTorch's y = x @ W.T + b.
    """
    ks = jax.random.split(key, 8)

    def lin(kw, kb, fan_in, fan_out):
        bound = 1.0 / jnp.sqrt(fan_in)
        w = jax.random.uniform(kw, (fan_in, fan_out), jnp.float32, -bound, bound)
        b = jax.random.uniform(kb, (1, fan_out), jnp.float32, -bound, bound)
        return w, b

    w11, b11 = lin(ks[0], ks[1], 5, 16)
    w12, b12 = lin(ks[2], ks[3], 5, 16)
    w2, b2 = lin(ks[4], ks[5], 32, 32)
    w3, b3 = lin(ks[6], ks[7], 32, 7)
    return dict(w11=w11, b11=b11, w12=w12, b12=b12, w2=w2, b2=b2, w3=w3, b3=b3)


def _round_up(n, m):
    return ((n + m - 1) // m) * m


def _fuse_layer1(params):
    """Block-diagonal fusion of l11/l12 -> W1 (10, 32), b1 (1, 32).

    Columns 0:16 of x @ W1 equal x[:, 0:5] @ w11; columns 16:32 equal
    x[:, 5:10] @ w12 — mathematically identical to branch + concat.
    """
    w11, w12 = params["w11"], params["w12"]
    z = jnp.zeros((5, 16), jnp.float32)
    w1 = jnp.concatenate(
        [jnp.concatenate([w11, z], axis=1),
         jnp.concatenate([z, w12], axis=1)], axis=0)           # (10, 32)
    b1 = jnp.concatenate([params["b11"], params["b12"]], axis=1)  # (1, 32)
    return w1, b1


def model_forward(x, params, tb=1024):
    """x: (B, 10) float32 -> (B, 7) float32."""
    B = x.shape[0]

    # Batch tile: large (default 1024 rows ~= 0.28 MB of activations, far under
    # every generation's VMEM budget incl. v7x), clamped so a tiny demo batch
    # does not allocate a huge tile. Must stay a multiple of 8 (sublanes).
    tb = min(tb, _round_up(B, 8))
    Bp = _round_up(B, tb)
    if Bp != B:
        x = jnp.pad(x, ((0, Bp - B), (0, 0)))   # padded rows are masked off below

    w1, b1 = _fuse_layer1(params)
    w2, b2 = params["w2"], params["b2"]
    w3, b3 = params["w3"], params["b3"]

    full = lambda shape: pl.BlockSpec(shape, lambda i: (0,) * len(shape))

    out = pl.pallas_call(
        _mlp_kernel,
        out_shape=jax.ShapeDtypeStruct((Bp, 7), jnp.float32),
        grid_spec=pltpu.PrefetchScalarGridSpec(
            num_scalar_prefetch=0,
            grid=(Bp // tb,),
            in_specs=[
                pl.BlockSpec((tb, 10), lambda i: (i, 0)),   # x tile
                full((10, 32)), full((1, 32)),              # fused layer 1
                full((32, 32)), full((1, 32)),              # layer 2
                full((32, 7)),  full((1, 7)),               # layer 3
            ],
            out_specs=pl.BlockSpec((tb, 7), lambda i: (i, 0)),
        ),
        compiler_params=pltpu.CompilerParams(
            # "parallel" lets v7x shard grid steps across both TensorCores.
            dimension_semantics=("parallel",)),
    )(x, w1, b1, w2, b2, w3, b3)

    return out[:B]


def _reference(x, params):
    """Pure-JAX mirror of the PyTorch Model.forward."""
    x11 = jnp.maximum(x[:, 0:5] @ params["w11"] + params["b11"], 0.0)
    x12 = jnp.maximum(x[:, 5:10] @ params["w12"] + params["b12"], 0.0)
    h = jnp.concatenate([x11, x12], axis=1)
    h = jnp.maximum(h @ params["w2"] + params["b2"], 0.0)
    return h @ params["w3"] + params["b3"]


if __name__ == "__main__":
    key = jax.random.PRNGKey(0)
    k_x, k_p = jax.random.split(key)

    params = init_params(k_p)

    # Small demo batch (tile clamps down to 8 rows automatically).
    B = 8
    x = jax.random.normal(k_x, (B, 10), dtype=jnp.float32)
    y = jax.block_until_ready(model_forward(x, params))
    y_ref = _reference(x, params)
    assert y.shape == (B, 7)
    assert jnp.allclose(y, y_ref, atol=1e-5, rtol=1e-5)

    # Non-multiple batch exercises the padding / tail path.
    B2 = 20
    x2 = jax.random.normal(jax.random.PRNGKey(1), (B2, 10), dtype=jnp.float32)
    y2 = jax.block_until_ready(model_forward(x2, params, tb=8))
    y2_ref = _reference(x2, params)
    assert y2.shape == (B2, 7)
    assert jnp.allclose(y2, y2_ref, atol=1e-5, rtol=1e-5)

    print("KERNEL_OK")
</pallas_src>

<mosaic_0001>
module attributes {stable_mosaic.version = 11 : i64} {
  func.func @_mlp_kernel(%arg0: i32, %arg1: memref<8x10xf32, #tpu.memory_space<vmem>>, %arg2: memref<10x32xf32, #tpu.memory_space<vmem>>, %arg3: memref<1x32xf32, #tpu.memory_space<vmem>>, %arg4: memref<32x32xf32, #tpu.memory_space<vmem>>, %arg5: memref<1x32xf32, #tpu.memory_space<vmem>>, %arg6: memref<32x7xf32, #tpu.memory_space<vmem>>, %arg7: memref<1x7xf32, #tpu.memory_space<vmem>>, %arg8: memref<8x7xf32, #tpu.memory_space<vmem>>) attributes {dimension_semantics = [#tpu.dimension_semantics<parallel>], iteration_bounds = array<i64: 1>, scalar_prefetch = 0 : i64, scratch_operands = 0 : i64, tpu.core_type = #tpu.core_type<tc>, window_params = [{transform_indices = @transform_0, window_bounds = array<i64: 8, 10>}, {pipeline_mode = #tpu.pipeline_mode<synchronous>, transform_indices = @transform_1, window_bounds = array<i64: 10, 32>}, {pipeline_mode = #tpu.pipeline_mode<synchronous>, transform_indices = @transform_2, window_bounds = array<i64: 1, 32>}, {pipeline_mode = #tpu.pipeline_mode<synchronous>, transform_indices = @transform_3, window_bounds = array<i64: 32, 32>}, {pipeline_mode = #tpu.pipeline_mode<synchronous>, transform_indices = @transform_4, window_bounds = array<i64: 1, 32>}, {pipeline_mode = #tpu.pipeline_mode<synchronous>, transform_indices = @transform_5, window_bounds = array<i64: 32, 7>}, {pipeline_mode = #tpu.pipeline_mode<synchronous>, transform_indices = @transform_6, window_bounds = array<i64: 1, 7>}, {transform_indices = @transform_7, window_bounds = array<i64: 8, 7>}]} {
    %c0 = arith.constant 0 : index
    %c0_0 = arith.constant 0 : index
    %0 = vector.load %arg1[%c0, %c0_0] : memref<8x10xf32, #tpu.memory_space<vmem>>, vector<8x10xf32>
    %c0_1 = arith.constant 0 : index
    %c0_2 = arith.constant 0 : index
    %1 = vector.load %arg2[%c0_1, %c0_2] : memref<10x32xf32, #tpu.memory_space<vmem>>, vector<10x32xf32>
    %cst = arith.constant dense<0.000000e+00> : vector<8x32xf32>
    %2 = tpu.matmul %0, %1, %cst {dimension_numbers = #tpu.dot_dimension_numbers<[1], [0], [0], [1], [0, 0, 1, 1], [], []>} : vector<8x10xf32>, vector<10x32xf32>, vector<8x32xf32> -> vector<8x32xf32>
    %c0_3 = arith.constant 0 : index
    %c0_4 = arith.constant 0 : index
    %3 = vector.load %arg3[%c0_3, %c0_4] : memref<1x32xf32, #tpu.memory_space<vmem>>, vector<1x32xf32>
    %4 = vector.broadcast %3 : vector<1x32xf32> to vector<8x32xf32>
    %5 = arith.addf %2, %4 : vector<8x32xf32>
    %cst_5 = arith.constant 0.000000e+00 : f32
    %6 = vector.broadcast %cst_5 : f32 to vector<8x32xf32>
    %7 = arith.maximumf %5, %6 : vector<8x32xf32>
    %c0_6 = arith.constant 0 : index
    %c0_7 = arith.constant 0 : index
    %8 = vector.load %arg4[%c0_6, %c0_7] : memref<32x32xf32, #tpu.memory_space<vmem>>, vector<32x32xf32>
    %cst_8 = arith.constant dense<0.000000e+00> : vector<8x32xf32>
    %9 = tpu.matmul %7, %8, %cst_8 {dimension_numbers = #tpu.dot_dimension_numbers<[1], [0], [0], [1], [0, 0, 1, 1], [], []>} : vector<8x32xf32>, vector<32x32xf32>, vector<8x32xf32> -> vector<8x32xf32>
    %c0_9 = arith.constant 0 : index
    %c0_10 = arith.constant 0 : index
    %10 = vector.load %arg5[%c0_9, %c0_10] : memref<1x32xf32, #tpu.memory_space<vmem>>, vector<1x32xf32>
    %11 = vector.broadcast %10 : vector<1x32xf32> to vector<8x32xf32>
    %12 = arith.addf %9, %11 : vector<8x32xf32>
    %cst_11 = arith.constant 0.000000e+00 : f32
    %13 = vector.broadcast %cst_11 : f32 to vector<8x32xf32>
    %14 = arith.maximumf %12, %13 : vector<8x32xf32>
    %c0_12 = arith.constant 0 : index
    %c0_13 = arith.constant 0 : index
    %15 = vector.load %arg6[%c0_12, %c0_13] : memref<32x7xf32, #tpu.memory_space<vmem>>, vector<32x7xf32>
    %cst_14 = arith.constant dense<0.000000e+00> : vector<8x7xf32>
    %16 = tpu.matmul %14, %15, %cst_14 {dimension_numbers = #tpu.dot_dimension_numbers<[1], [0], [0], [1], [0, 0, 1, 1], [], []>} : vector<8x32xf32>, vector<32x7xf32>, vector<8x7xf32> -> vector<8x7xf32>
    %c0_15 = arith.constant 0 : index
    %c0_16 = arith.constant 0 : index
    %17 = vector.load %arg7[%c0_15, %c0_16] : memref<1x7xf32, #tpu.memory_space<vmem>>, vector<1x7xf32>
    %18 = vector.broadcast %17 : vector<1x7xf32> to vector<8x7xf32>
    %19 = arith.addf %16, %18 : vector<8x7xf32>
    %c0_17 = arith.constant 0 : index
    %c0_18 = arith.constant 0 : index
    %20 = vector.load %arg8[%c0_17, %c0_18] : memref<8x7xf32, #tpu.memory_space<vmem>>, vector<8x7xf32>
    tpu.vector_store %arg8[%c0_17, %c0_18], %19 {strides = array<i32>} : memref<8x7xf32, #tpu.memory_space<vmem>>, vector<8x7xf32>,
    return
  }
  func.func @transform_0(%arg0: i32) -> (i32, i32) {
    %c0_i32 = arith.constant 0 : i32
    %c0_i32_0 = arith.constant 0 : i32
    return %arg0, %c0_i32 : i32, i32
  }
  func.func @transform_1(%arg0: i32) -> (i32, i32) {
    %c0_i32 = arith.constant 0 : i32
    %c0_i32_0 = arith.constant 0 : i32
    %c0_i32_1 = arith.constant 0 : i32
    return %c0_i32, %c0_i32_0 : i32, i32
  }
  func.func @transform_2(%arg0: i32) -> (i32, i32) {
    %c0_i32 = arith.constant 0 : i32
    %c0_i32_0 = arith.constant 0 : i32
    %c0_i32_1 = arith.constant 0 : i32
    return %c0_i32, %c0_i32_0 : i32, i32
  }
  func.func @transform_3(%arg0: i32) -> (i32, i32) {
    %c0_i32 = arith.constant 0 : i32
    %c0_i32_0 = arith.constant 0 : i32
    %c0_i32_1 = arith.constant 0 : i32
    return %c0_i32, %c0_i32_0 : i32, i32
  }
  func.func @transform_4(%arg0: i32) -> (i32, i32) {
    %c0_i32 = arith.constant 0 : i32
    %c0_i32_0 = arith.constant 0 : i32
    %c0_i32_1 = arith.constant 0 : i32
    return %c0_i32, %c0_i32_0 : i32, i32
  }
  func.func @transform_5(%arg0: i32) -> (i32, i32) {
    %c0_i32 = arith.constant 0 : i32
    %c0_i32_0 = arith.constant 0 : i32
    %c0_i32_1 = arith.constant 0 : i32
    return %c0_i32, %c0_i32_0 : i32, i32
  }
  func.func @transform_6(%arg0: i32) -> (i32, i32) {
    %c0_i32 = arith.constant 0 : i32
    %c0_i32_0 = arith.constant 0 : i32
    %c0_i32_1 = arith.constant 0 : i32
    return %c0_i32, %c0_i32_0 : i32, i32
  }
  func.func @transform_7(%arg0: i32) -> (i32, i32) {
    %c0_i32 = arith.constant 0 : i32
    %c0_i32_0 = arith.constant 0 : i32
    return %arg0, %c0_i32 : i32, i32
  }
}

</mosaic_0001>

<llo_original>
// kernel: tpu_custom_call.1
$region0: #{tpu_custom_call.1}
  #allocation0 [shape = 'u32[]', space=smem, size = 0x4, offset = 0x4, fixed_abs, tag = 'smem constant byte address 0x4 - core index']
  #allocation1 [shape = 'u32[144,128]{1,0:T(1,128)}', space=vmem, size = 0x12000, scoped, tag = 'internal scratch']
  %s0 = inlined_call_operand.vmem [shape: f32[8,10], index: 0, kind: input, shape index: {}]
  %s1 = inlined_call_operand.hbm [shape: f32[10,32], index: 1, kind: input, shape index: {}]
  %s2 = inlined_call_operand.vmem [shape: f32[1,32], index: 2, kind: input, shape index: {}]
  %s3 = inlined_call_operand.vmem [shape: f32[32,32], index: 3, kind: input, shape index: {}]
  %s4 = inlined_call_operand.hbm [shape: f32[1,32], index: 4, kind: input, shape index: {}]
  %s5 = inlined_call_operand.vmem [shape: f32[32,7], index: 5, kind: input, shape index: {}]
  %s6 = inlined_call_operand.vmem [shape: f32[1,7], index: 6, kind: input, shape index: {}]
  %s7 = inlined_call_operand.hbm [shape: f32[8,7], index: 7, kind: output, shape index: {}]
  %s8 = sld [smem:[#allocation0]]
  $region46: #{tpu_custom_call.1} parent=0
    _
  %s10 = ssub.s32 1, %s8
  %s11 = scalar_select 0, %s10, %s8
  $region1: #{tpu_custom_call.1} parent=0
    #allocation2 [shape = 'u8[8192]{0}', space=vmem, size = 0x2000, scoped, tag = 'input window, operand 1, single buffered']
    #allocation3 [shape = 's32[1]{0}', space=sflag, size = 0x4, scoped, tag = 'scoped memory for tpu_custom_call.1']
    #allocation4 [shape = 's32[1]{0}', space=sflag, size = 0x4, scoped, tag = 'scoped memory for tpu_custom_call.1']
    #allocation5 [shape = 'u8[512]{0}', space=vmem, size = 0x400, scoped, tag = 'input window, operand 4, single buffered']
    #allocation6 [shape = 's32[1]{0}', space=sflag, size = 0x4, scoped, tag = 'scoped memory for tpu_custom_call.1']
    #allocation7 [shape = 'u8[4096]{0}', space=vmem, size = 0x1000, scoped, tag = 'output window, operand 0, single buffered']
    %12 = vsyncpa [#allocation3], 0
    %13 = vsyncpa [#allocation6], 0
    %14 = vsyncpa [#allocation4], 0
    // Predicated region
    $region2: #{tpu_custom_call.1} parent=1 // pred_check
      _
    $region3: #{tpu_custom_call.1} parent=1 // pred_check_branch
      %16 = sbr.rel (0) target = $region5
    $region4: #{tpu_custom_call.1} parent=1 // pred_region
      _
    $region5: #{tpu_custom_call.1} parent=1 // pred_fallthru
      _
    // Predicated region
    $region6: #{tpu_custom_call.1} parent=1 // pred_check
      _
    $region7: #{tpu_custom_call.1} parent=1 // pred_check_branch
      %18 = sbr.rel (0) target = $region9
    $region8: #{tpu_custom_call.1} parent=1 // pred_region
      %s20 = ssub.s32 256, 256
      %21 = vsyncadd [#allocation3], %s20
      %s22 = sshll.u32 [#allocation2], 4
      %s23 = int_to_ptr.vmem [resolvable:$true] %s22
      %28 = dma.hbm_to_vmem [thread:$0]  %s1, 256, %s23, [#allocation3], 128, 128, 8
    $region9: #{tpu_custom_call.1} parent=1 // pred_fallthru
      _
    // Predicated region
    $region10: #{tpu_custom_call.1} parent=1 // pred_check
      _
    $region11: #{tpu_custom_call.1} parent=1 // pred_check_branch
      %30 = sbr.rel (0) target = $region13
    $region12: #{tpu_custom_call.1} parent=1 // pred_region
      _
    $region13: #{tpu_custom_call.1} parent=1 // pred_fallthru
      _
    // Predicated region
    $region14: #{tpu_custom_call.1} parent=1 // pred_check
      _
    $region15: #{tpu_custom_call.1} parent=1 // pred_check_branch
      %32 = sbr.rel (0) target = $region17
    $region16: #{tpu_custom_call.1} parent=1 // pred_region
      _
    $region17: #{tpu_custom_call.1} parent=1 // pred_fallthru
      _
    // Predicated region
    $region18: #{tpu_custom_call.1} parent=1 // pred_check
      _
    $region19: #{tpu_custom_call.1} parent=1 // pred_check_branch
      %34 = sbr.rel (0) target = $region21
    $region20: #{tpu_custom_call.1} parent=1 // pred_region
      %s36 = ssub.s32 16, 16
      %37 = vsyncadd [#allocation6], %s36
      %s39 = sshll.u32 [#allocation5], 4
      %s40 = int_to_ptr.vmem [resolvable:$true] %s39
      %42 = dma.hbm_to_vmem [thread:$0]  %s4, 16, %s40, [#allocation6]
    $region21: #{tpu_custom_call.1} parent=1 // pred_fallthru
      _
    // Predicated region
    $region22: #{tpu_custom_call.1} parent=1 // pred_check
      _
    $region23: #{tpu_custom_call.1} parent=1 // pred_check_branch
      %44 = sbr.rel (0) target = $region25
    $region24: #{tpu_custom_call.1} parent=1 // pred_region
      _
    $region25: #{tpu_custom_call.1} parent=1 // pred_fallthru
      _
    // Predicated region
    $region26: #{tpu_custom_call.1} parent=1 // pred_check
      _
    $region27: #{tpu_custom_call.1} parent=1 // pred_check_branch
      %46 = sbr.rel (0) target = $region29
    $region28: #{tpu_custom_call.1} parent=1 // pred_region
      _
    $region29: #{tpu_custom_call.1} parent=1 // pred_fallthru
      _
    // Predicated region
    $region30: #{tpu_custom_call.1} parent=1 // pred_check
      _
    $region31: #{tpu_custom_call.1} parent=1 // pred_check_branch
      %48 = sbr.rel (0) target = $region33
    $region32: #{tpu_custom_call.1} parent=1 // pred_region
      %49 = dma.done [#allocation3], 256
    $region33: #{tpu_custom_call.1} parent=1 // pred_fallthru
      _
    // Predicated region
    $region34: #{tpu_custom_call.1} parent=1 // pred_check
      _
    $region35: #{tpu_custom_call.1} parent=1 // pred_check_branch
      %51 = sbr.rel (0) target = $region37
    $region36: #{tpu_custom_call.1} parent=1 // pred_region
      %52 = dma.done [#allocation6], 16
    $region37: #{tpu_custom_call.1} parent=1 // pred_fallthru
      _
    %v53 = vld [vmem:[%s0] sm:$0xff]
    %v54 = vld [vmem:[#allocation2] sm:$0xff]
    %v55 = vld [vmem:[#allocation2 + $0x8] sm:$0x3]
    %v56 = vld [vmem:[%s2] sm:$0x1]
    %v58 = vlaneseq
    %v59 = vshrl.u32 %v58, 7
    %v60 = vsub.s32 0, %v59
    %v61 = vrot.slane %v56, %v60
    %vm63 = vcmask 80896
    %v65 = vsel %vm63, %v53, 0
    %vm67 = vcmask 1041408
    %v69 = vsel %vm67, %v55, 0
    %71 = vmatprep.subr.mxu0 0.0
    %72 = vmatpush1.msra.mxu0 0.0
    %73 = vmatprep.subr.mxu0 0.0
    %74 = vmatpush1.msra.mxu0 0.0
    %75 = vmatprep.subr.mxu0 0.0
    %76 = vmatpush1.msra.mxu0 0.0
    %77 = vmatprep.subr.mxu0 0.0
    %78 = vmatpush1.msra.mxu0 0.0
    %79 = vmatprep.subr.mxu0 0.0
    %80 = vmatpush1.msra.mxu0 0.0
    %81 = vmatprep.subr.mxu0 0.0
    %82 = vmatpush1.msra.mxu0 0.0
    %83 = vmatprep.subr.mxu0 0.0
    %84 = vmatpush1.msra.mxu0 0.0
    %85 = vmatprep.subr.mxu0 0.0
    %86 = vmatpush1.msra.mxu0 0.0
    %87 = vmatprep.subr.mxu0 0.0
    %88 = vmatpush1.msra.mxu0 0.0
    %89 = vmatprep.subr.mxu0 0.0
    %90 = vmatpush1.msra.mxu0 0.0
    %91 = vmatprep.subr.mxu0 0.0
    %92 = vmatpush1.msra.mxu0 0.0
    %93 = vmatprep.subr.mxu0 0.0
    %94 = vmatpush1.msra.mxu0 0.0
    %95 = vmatprep.subr.mxu0 0.0
    %96 = vmatpush1.msra.mxu0 0.0
    %97 = vmatprep.subr.mxu0 0.0
    %98 = vmatpush1.msra.mxu0 0.0
    %99 = vmatprep.subr.mxu0 0.0
    %100 = vmatpush1.msra.mxu0 %v69
    %101 = vmatprep.subr.mxu0 0.0
    %102 = vmatpush1.msra.mxu0 %v54
    %103 = vmatprep.subr.mxu0 0.0
    %104 = vmatpush2.msra.mxu0 0.0
    %105 = vmatprep.subr.mxu0 0.0
    %106 = vmatpush2.msra.mxu0 0.0
    %107 = vmatprep.subr.mxu0 0.0
    %108 = vmatpush2.msra.mxu0 0.0
    %109 = vmatprep.subr.mxu0 0.0
    %110 = vmatpush2.msra.mxu0 0.0
    %111 = vmatprep.subr.mxu0 0.0
    %112 = vmatpush2.msra.mxu0 0.0
    %113 = vmatprep.subr.mxu0 0.0
    %114 = vmatpush2.msra.mxu0 0.0
    %115 = vmatprep.subr.mxu0 0.0
    %116 = vmatpush2.msra.mxu0 0.0
    %117 = vmatprep.subr.mxu0 0.0
    %118 = vmatpush2.msra.mxu0 0.0
    %119 = vmatprep.subr.mxu0 0.0
    %120 = vmatpush2.msra.mxu0 0.0
    %121 = vmatprep.subr.mxu0 0.0
    %122 = vmatpush2.msra.mxu0 0.0
    %123 = vmatprep.subr.mxu0 0.0
    %124 = vmatpush2.msra.mxu0 0.0
    %125 = vmatprep.subr.mxu0 0.0
    %126 = vmatpush2.msra.mxu0 0.0
    %127 = vmatprep.subr.mxu0 0.0
    %128 = vmatpush2.msra.mxu0 0.0
    %129 = vmatprep.subr.mxu0 0.0
    %130 = vmatpush2.msra.mxu0 0.0
    %131 = vmatprep.subr.mxu0 0.0
    %132 = vmatpush2.msra.mxu0 0.0
    %133 = vmatprep.subr.mxu0 0.0
    %134 = vmatpush2.msra.mxu0 0.0
    %135 = vmatprep.mubr.f32.mxu0 0.0
    %136 = vmatmul.mubr.f32.gmra.mxu0 %v65
    %v137 = vpop.f32.mrf.mxu0
    %v138 = vadd.f32 %v61, %v137
    %v139 = vpop.f32.mrf.mxu0
    %140 = vdwg.mxu0
    %v141 = vmax.f32 %v138, 0.0
    %v142 = vld [vmem:[%s3] sm:$0xff]
    %v143 = vld [vmem:[%s3 + $0x8] sm:$0xff]
    %v144 = vld [vmem:[%s3 + $0x10] sm:$0xff]
    %v145 = vld [vmem:[%s3 + $0x18] sm:$0xff]
    %v146 = vld [vmem:[#allocation5] sm:$0x1]
    %v148 = vlaneseq
    %v149 = vshrl.u32 %v148, 7
    %v150 = vsub.s32 0, %v149
    %v151 = vrot.slane %v146, %v150
    %vm153 = vcmask 261120
    %v155 = vsel %vm153, %v141, 0
    %157 = vmatprep.subr.mxu0 0.0
    %158 = vmatpush1.msra.mxu0 0.0
    %159 = vmatprep.subr.mxu0 0.0
    %160 = vmatpush1.msra.mxu0 0.0
    %161 = vmatprep.subr.mxu0 0.0
    %162 = vmatpush1.msra.mxu0 0.0
    %163 = vmatprep.subr.mxu0 0.0
    %164 = vmatpush1.msra.mxu0 0.0
    %165 = vmatprep.subr.mxu0 0.0
    %166 = vmatpush1.msra.mxu0 0.0
    %167 = vmatprep.subr.mxu0 0.0
    %168 = vmatpush1.msra.mxu0 0.0
    %169 = vmatprep.subr.mxu0 0.0
    %170 = vmatpush1.msra.mxu0 0.0
    %171 = vmatprep.subr.mxu0 0.0
    %172 = vmatpush1.msra.mxu0 0.0
    %173 = vmatprep.subr.mxu0 0.0
    %174 = vmatpush1.msra.mxu0 0.0
    %175 = vmatprep.subr.mxu0 0.0
    %176 = vmatpush1.msra.mxu0 0.0
    %177 = vmatprep.subr.mxu0 0.0
    %178 = vmatpush1.msra.mxu0 0.0
    %179 = vmatprep.subr.mxu0 0.0
    %180 = vmatpush1.msra.mxu0 0.0
    %181 = vmatprep.subr.mxu0 0.0
    %182 = vmatpush1.msra.mxu0 %v145
    %183 = vmatprep.subr.mxu0 0.0
    %184 = vmatpush1.msra.mxu0 %v144
    %185 = vmatprep.subr.mxu0 0.0
    %186 = vmatpush1.msra.mxu0 %v143
    %187 = vmatprep.subr.mxu0 0.0
    %188 = vmatpush1.msra.mxu0 %v142
    %189 = vmatprep.subr.mxu0 0.0
    %190 = vmatpush2.msra.mxu0 0.0
    %191 = vmatprep.subr.mxu0 0.0
    %192 = vmatpush2.msra.mxu0 0.0
    %193 = vmatprep.subr.mxu0 0.0
    %194 = vmatpush2.msra.mxu0 0.0
    %195 = vmatprep.subr.mxu0 0.0
    %196 = vmatpush2.msra.mxu0 0.0
    %197 = vmatprep.subr.mxu0 0.0
    %198 = vmatpush2.msra.mxu0 0.0
    %199 = vmatprep.subr.mxu0 0.0
    %200 = vmatpush2.msra.mxu0 0.0
    %201 = vmatprep.subr.mxu0 0.0
    %202 = vmatpush2.msra.mxu0 0.0
    %203 = vmatprep.subr.mxu0 0.0
    %204 = vmatpush2.msra.mxu0 0.0
    %205 = vmatprep.subr.mxu0 0.0
    %206 = vmatpush2.msra.mxu0 0.0
    %207 = vmatprep.subr.mxu0 0.0
    %208 = vmatpush2.msra.mxu0 0.0
    %209 = vmatprep.subr.mxu0 0.0
    %210 = vmatpush2.msra.mxu0 0.0
    %211 = vmatprep.subr.mxu0 0.0
    %212 = vmatpush2.msra.mxu0 0.0
    %213 = vmatprep.subr.mxu0 0.0
    %214 = vmatpush2.msra.mxu0 0.0
    %215 = vmatprep.subr.mxu0 0.0
    %216 = vmatpush2.msra.mxu0 0.0
    %217 = vmatprep.subr.mxu0 0.0
    %218 = vmatpush2.msra.mxu0 0.0
    %219 = vmatprep.subr.mxu0 0.0
    %220 = vmatpush2.msra.mxu0 0.0
    %221 = vmatprep.mubr.f32.mxu0 0.0
    %222 = vmatmul.mubr.f32.gmra.mxu0 %v155
    %v223 = vpop.f32.mrf.mxu0
    %v224 = vadd.f32 %v151, %v223
    %v225 = vpop.f32.mrf.mxu0
    %226 = vdwg.mxu0
    %v227 = vmax.f32 %v224, 0.0
    %v228 = vld [vmem:[%s5] sm:$0xff]
    %v229 = vld [vmem:[%s5 + $0x8] sm:$0xff]
    %v230 = vld [vmem:[%s5 + $0x10] sm:$0xff]
    %v231 = vld [vmem:[%s5 + $0x18] sm:$0xff]
    %v232 = vld [vmem:[%s6] sm:$0x1]
    %v234 = vlaneseq
    %v235 = vshrl.u32 %v234, 7
    %v236 = vsub.s32 0, %v235
    %v237 = vrot.slane %v232, %v236
    %v240 = vsel %vm153, %v227, 0
    %242 = vmatprep.subr.mxu0 0.0
    %243 = vmatpush1.msra.mxu0 0.0
    %244 = vmatprep.subr.mxu0 0.0
    %245 = vmatpush1.msra.mxu0 0.0
    %246 = vmatprep.subr.mxu0 0.0
    %247 = vmatpush1.msra.mxu0 0.0
    %248 = vmatprep.subr.mxu0 0.0
    %249 = vmatpush1.msra.mxu0 0.0
    %250 = vmatprep.subr.mxu0 0.0
    %251 = vmatpush1.msra.mxu0 0.0
    %252 = vmatprep.subr.mxu0 0.0
    %253 = vmatpush1.msra.mxu0 0.0
    %254 = vmatprep.subr.mxu0 0.0
    %255 = vmatpush1.msra.mxu0 0.0
    %256 = vmatprep.subr.mxu0 0.0
    %257 = vmatpush1.msra.mxu0 0.0
    %258 = vmatprep.subr.mxu0 0.0
    %259 = vmatpush1.msra.mxu0 0.0
    %260 = vmatprep.subr.mxu0 0.0
    %261 = vmatpush1.msra.mxu0 0.0
    %262 = vmatprep.subr.mxu0 0.0
    %263 = vmatpush1.msra.mxu0 0.0
    %264 = vmatprep.subr.mxu0 0.0
    %265 = vmatpush1.msra.mxu0 0.0
    %266 = vmatprep.subr.mxu0 0.0
    %267 = vmatpush1.msra.mxu0 %v231
    %268 = vmatprep.subr.mxu0 0.0
    %269 = vmatpush1.msra.mxu0 %v230
    %270 = vmatprep.subr.mxu0 0.0
    %271 = vmatpush1.msra.mxu0 %v229
    %272 = vmatprep.subr.mxu0 0.0
    %273 = vmatpush1.msra.mxu0 %v228
    %274 = vmatprep.subr.mxu0 0.0
    %275 = vmatpush2.msra.mxu0 0.0
    %276 = vmatprep.subr.mxu0 0.0
    %277 = vmatpush2.msra.mxu0 0.0
    %278 = vmatprep.subr.mxu0 0.0
    %279 = vmatpush2.msra.mxu0 0.0
    %280 = vmatprep.subr.mxu0 0.0
    %281 = vmatpush2.msra.mxu0 0.0
    %282 = vmatprep.subr.mxu0 0.0
    %283 = vmatpush2.msra.mxu0 0.0
    %284 = vmatprep.subr.mxu0 0.0
    %285 = vmatpush2.msra.mxu0 0.0
    %286 = vmatprep.subr.mxu0 0.0
    %287 = vmatpush2.msra.mxu0 0.0
    %288 = vmatprep.subr.mxu0 0.0
    %289 = vmatpush2.msra.mxu0 0.0
    %290 = vmatprep.subr.mxu0 0.0
    %291 = vmatpush2.msra.mxu0 0.0
    %292 = vmatprep.subr.mxu0 0.0
    %293 = vmatpush2.msra.mxu0 0.0
    %294 = vmatprep.subr.mxu0 0.0
    %295 = vmatpush2.msra.mxu0 0.0
    %296 = vmatprep.subr.mxu0 0.0
    %297 = vmatpush2.msra.mxu0 0.0
    %298 = vmatprep.subr.mxu0 0.0
    %299 = vmatpush2.msra.mxu0 0.0
    %300 = vmatprep.subr.mxu0 0.0
    %301 = vmatpush2.msra.mxu0 0.0
    %302 = vmatprep.subr.mxu0 0.0
    %303 = vmatpush2.msra.mxu0 0.0
    %304 = vmatprep.subr.mxu0 0.0
    %305 = vmatpush2.msra.mxu0 0.0
    %306 = vmatprep.mubr.f32.mxu0 0.0
    %307 = vmatmul.mubr.f32.gmra.mxu0 %v240
    %v308 = vpop.f32.mrf.mxu0
    %v309 = vadd.f32 %v237, %v308
    %v310 = vpop.f32.mrf.mxu0
    %311 = vdwg.mxu0
    %vm312 = vcmask 56320
    %313 = vst.msk [vmem:[#allocation7] sm:$0xff] %vm312, %v309
    // Predicated region
    $region38: #{tpu_custom_call.1} parent=1 // pred_check
      _
    $region39: #{tpu_custom_call.1} parent=1 // pred_check_branch
      %315 = sbr.rel (0) target = $region41
    $region40: #{tpu_custom_call.1} parent=1 // pred_region
      %s317 = ssub.s32 128, 128
      %318 = vsyncadd [#allocation4], %s317
      %s320 = sshll.u32 [#allocation7], 4
      %s321 = int_to_ptr.vmem [resolvable:$true] %s320
      %323 = dma.vmem_to_hbm [thread:$0]  %s321, 128, %s7, [#allocation4]
    $region41: #{tpu_custom_call.1} parent=1 // pred_fallthru
      _
    // Predicated region
    $region42: #{tpu_custom_call.1} parent=1 // pred_check
      _
    $region43: #{tpu_custom_call.1} parent=1 // pred_check_branch
      %325 = sbr.rel (0) target = $region45
    $region44: #{tpu_custom_call.1} parent=1 // pred_region
      %326 = dma.done [#allocation4], 128
    $region45: #{tpu_custom_call.1} parent=1 // pred_fallthru
      _
    %327 = vsyncpa [#allocation3], 1
    %328 = vsyncpa [#allocation6], 1
    %329 = vsyncpa [#allocation4], 1

</llo_original>
